<compile_context>
chip_gen: v7x
topology: tpu7x:2x2x1
jax: 0.10.0
libtpu: 0.0.40
codegen_flags: <defaults>
</compile_context>

<pallas_src>
import jax
import jax.numpy as jnp
from jax.experimental import pallas as pl
from jax.experimental.pallas import tpu as pltpu

LANE = 128


def _round_up(x, m):
    return ((x + m - 1) // m) * m


def _traced_policy_kernel(obs_ref, w1_ref, b1_ref, w2_ref, b2_ref, out_ref):
    # hidden = tanh(obs @ W1 + b1): bf16 MXU inputs, f32 accumulation,
    # f32 bias add + tanh (EUP).
    h = jnp.dot(obs_ref[...], w1_ref[...], preferred_element_type=jnp.float32)
    h = jnp.tanh(h + b1_ref[...])
    # action = hidden @ W2 + b2 (hidden re-cast to bf16 for the MXU).
    a = jnp.dot(h.astype(jnp.bfloat16), w2_ref[...],
                preferred_element_type=jnp.float32)
    out_ref[...] = (a + b2_ref[...]).astype(out_ref.dtype)


def traced_policy_forward(obs, w1, b1, w2, b2, *, tb=256):
    """Pallas implementation of TracedPolicyWrapper.forward(obs).

    obs: [B, input_size] float32
    w1:  [input_size, hidden], b1: [1, hidden]
    w2:  [hidden, output_size], b2: [1, output_size]
    returns: [B, output_size] float32
    """
    B, input_size = obs.shape
    hidden = w1.shape[1]
    output_size = w2.shape[1]

    # --- layout plumbing in the wrapper (pure padding, no extra compute) ----
    # Pad hidden and output to a full 128-lane width so the second matmul's
    # N dim and the output stores are lane-dense. Padded W/b columns are zero,
    # so padded hidden columns are tanh(0)=0 and padded output columns are 0.
    h_pad = _round_up(hidden, LANE)
    n_pad = _round_up(output_size, LANE)

    # Batch tile: multiple of 16 (bf16 sublane packing); cap at `tb`.
    b_tile = min(tb, _round_up(B, 16))
    b_pad = _round_up(B, b_tile)
    n_tiles = pl.cdiv(b_pad, b_tile)

    obs_p = jnp.zeros((b_pad, input_size), jnp.bfloat16).at[:B].set(
        obs.astype(jnp.bfloat16))
    w1_p = jnp.zeros((input_size, h_pad), jnp.bfloat16).at[:, :hidden].set(
        w1.astype(jnp.bfloat16))
    b1_p = jnp.zeros((1, h_pad), jnp.float32).at[:, :hidden].set(
        b1.astype(jnp.float32))
    w2_p = jnp.zeros((h_pad, n_pad), jnp.bfloat16).at[:hidden, :output_size].set(
        w2.astype(jnp.bfloat16))
    b2_p = jnp.zeros((1, n_pad), jnp.float32).at[:, :output_size].set(
        b2.astype(jnp.float32))

    out_padded = pl.pallas_call(
        _traced_policy_kernel,
        out_shape=jax.ShapeDtypeStruct((b_pad, n_pad), jnp.float32),
        grid=(n_tiles,),
        in_specs=[
            # obs tile marches over the batch; double-buffered by BlockSpec.
            pl.BlockSpec((b_tile, input_size), lambda i: (i, 0)),
            # Weights / biases: constant block index -> VMEM-resident,
            # DMA'd once, no re-fetch per grid step.
            pl.BlockSpec((input_size, h_pad), lambda i: (0, 0)),
            pl.BlockSpec((1, h_pad), lambda i: (0, 0)),
            pl.BlockSpec((h_pad, n_pad), lambda i: (0, 0)),
            pl.BlockSpec((1, n_pad), lambda i: (0, 0)),
        ],
        out_specs=pl.BlockSpec((b_tile, n_pad), lambda i: (i, 0)),
        compiler_params=pltpu.CompilerParams(
            # Batch axis is independent -> shard across TCs on v7x.
            dimension_semantics=("parallel",),
        ),
    )(obs_p, w1_p, b1_p, w2_p, b2_p)

    # Slice the real batch rows / action columns back out.
    return out_padded[:B, :output_size]


def init_params(key, input_size, hidden, output_size):
    """Deterministic synthetic parameter init (matches FNNPolicy layer shapes)."""
    k1, k2, k3, k4 = jax.random.split(key, 4)
    w1 = jax.random.normal(k1, (input_size, hidden), jnp.float32) * 0.1
    b1 = jax.random.normal(k2, (1, hidden), jnp.float32) * 0.01
    w2 = jax.random.normal(k3, (hidden, output_size), jnp.float32) * 0.1
    b2 = jax.random.normal(k4, (1, output_size), jnp.float32) * 0.01
    return w1, b1, w2, b2


if __name__ == "__main__":
    # Small shapes implied by the module: input_size = obs_space.flat_dim,
    # output_size = act_space.flat_dim; one hidden layer in the wrapped MLP.
    B = 2            # batch of observations
    input_size = 16  # obs flat_dim
    hidden = 32      # MLP hidden width
    output_size = 4  # act flat_dim

    key = jax.random.PRNGKey(0)
    k_obs, k_par, k_obs2 = jax.random.split(key, 3)
    obs = jax.random.uniform(k_obs, (B, input_size), jnp.float32, -1.0, 1.0)
    w1, b1, w2, b2 = init_params(k_par, input_size, hidden, output_size)

    act = traced_policy_forward(obs, w1, b1, w2, b2)
    act = jax.block_until_ready(act)

    # Correctness check against a pure-JAX f32 reference of the same forward.
    # Tolerance is loosened for bf16 MXU inputs with f32 accumulation.
    ref = jnp.tanh(obs @ w1 + b1) @ w2 + b2
    assert act.shape == (B, output_size)
    assert jnp.allclose(act, ref, atol=2e-2, rtol=2e-2)

    # Second check exercising a multi-tile grid (batch padding + pipelining).
    B2 = 40
    obs2 = jax.random.uniform(k_obs2, (B2, input_size), jnp.float32, -1.0, 1.0)
    act2 = jax.block_until_ready(
        traced_policy_forward(obs2, w1, b1, w2, b2, tb=16))
    ref2 = jnp.tanh(obs2 @ w1 + b1) @ w2 + b2
    assert act2.shape == (B2, output_size)
    assert jnp.allclose(act2, ref2, atol=2e-2, rtol=2e-2)

    print("KERNEL_OK")
</pallas_src>

<mosaic_0001>
module attributes {stable_mosaic.version = 11 : i64} {
  func.func @_traced_policy_kernel(%arg0: i32, %arg1: memref<16x16xbf16, #tpu.memory_space<vmem>>, %arg2: memref<16x128xbf16, #tpu.memory_space<vmem>>, %arg3: memref<1x128xf32, #tpu.memory_space<vmem>>, %arg4: memref<128x128xbf16, #tpu.memory_space<vmem>>, %arg5: memref<1x128xf32, #tpu.memory_space<vmem>>, %arg6: memref<16x128xf32, #tpu.memory_space<vmem>>) attributes {dimension_semantics = [#tpu.dimension_semantics<parallel>], iteration_bounds = array<i64: 1>, scalar_prefetch = 0 : i64, scratch_operands = 0 : i64, tpu.core_type = #tpu.core_type<tc>, window_params = [{transform_indices = @transform_0, window_bounds = array<i64: 16, 16>}, {pipeline_mode = #tpu.pipeline_mode<synchronous>, transform_indices = @transform_1, window_bounds = array<i64: 16, 128>}, {pipeline_mode = #tpu.pipeline_mode<synchronous>, transform_indices = @transform_2, window_bounds = array<i64: 1, 128>}, {pipeline_mode = #tpu.pipeline_mode<synchronous>, transform_indices = @transform_3, window_bounds = array<i64: 128, 128>}, {pipeline_mode = #tpu.pipeline_mode<synchronous>, transform_indices = @transform_4, window_bounds = array<i64: 1, 128>}, {transform_indices = @transform_5, window_bounds = array<i64: 16, 128>}]} {
    %c0 = arith.constant 0 : index
    %c0_0 = arith.constant 0 : index
    %0 = vector.load %arg1[%c0, %c0_0] : memref<16x16xbf16, #tpu.memory_space<vmem>>, vector<16x16xbf16>
    %c0_1 = arith.constant 0 : index
    %c0_2 = arith.constant 0 : index
    %1 = vector.load %arg2[%c0_1, %c0_2] : memref<16x128xbf16, #tpu.memory_space<vmem>>, vector<16x128xbf16>
    %cst = arith.constant dense<0.000000e+00> : vector<16x128xf32>
    %2 = tpu.matmul %0, %1, %cst {dimension_numbers = #tpu.dot_dimension_numbers<[1], [0], [0], [1], [0, 0, 1, 1], [], []>} : vector<16x16xbf16>, vector<16x128xbf16>, vector<16x128xf32> -> vector<16x128xf32>
    %c0_3 = arith.constant 0 : index
    %c0_4 = arith.constant 0 : index
    %3 = vector.load %arg3[%c0_3, %c0_4] : memref<1x128xf32, #tpu.memory_space<vmem>>, vector<1x128xf32>
    %4 = vector.broadcast %3 : vector<1x128xf32> to vector<16x128xf32>
    %5 = arith.addf %2, %4 : vector<16x128xf32>
    %6 = math.tanh %5 : vector<16x128xf32>
    %7 = arith.truncf %6 : vector<16x128xf32> to vector<16x128xbf16>
    %c0_5 = arith.constant 0 : index
    %c0_6 = arith.constant 0 : index
    %8 = vector.load %arg4[%c0_5, %c0_6] : memref<128x128xbf16, #tpu.memory_space<vmem>>, vector<128x128xbf16>
    %cst_7 = arith.constant dense<0.000000e+00> : vector<16x128xf32>
    %9 = tpu.matmul %7, %8, %cst_7 {dimension_numbers = #tpu.dot_dimension_numbers<[1], [0], [0], [1], [0, 0, 1, 1], [], []>} : vector<16x128xbf16>, vector<128x128xbf16>, vector<16x128xf32> -> vector<16x128xf32>
    %c0_8 = arith.constant 0 : index
    %c0_9 = arith.constant 0 : index
    %10 = vector.load %arg5[%c0_8, %c0_9] : memref<1x128xf32, #tpu.memory_space<vmem>>, vector<1x128xf32>
    %11 = vector.broadcast %10 : vector<1x128xf32> to vector<16x128xf32>
    %12 = arith.addf %9, %11 : vector<16x128xf32>
    %c0_10 = arith.constant 0 : index
    %c0_11 = arith.constant 0 : index
    %13 = vector.load %arg6[%c0_10, %c0_11] : memref<16x128xf32, #tpu.memory_space<vmem>>, vector<16x128xf32>
    tpu.vector_store %arg6[%c0_10, %c0_11], %12 {strides = array<i32>} : memref<16x128xf32, #tpu.memory_space<vmem>>, vector<16x128xf32>,
    return
  }
  func.func @transform_0(%arg0: i32) -> (i32, i32) {
    %c0_i32 = arith.constant 0 : i32
    %c0_i32_0 = arith.constant 0 : i32
    return %arg0, %c0_i32 : i32, i32
  }
  func.func @transform_1(%arg0: i32) -> (i32, i32) {
    %c0_i32 = arith.constant 0 : i32
    %c0_i32_0 = arith.constant 0 : i32
    %c0_i32_1 = arith.constant 0 : i32
    return %c0_i32, %c0_i32_0 : i32, i32
  }
  func.func @transform_2(%arg0: i32) -> (i32, i32) {
    %c0_i32 = arith.constant 0 : i32
    %c0_i32_0 = arith.constant 0 : i32
    %c0_i32_1 = arith.constant 0 : i32
    return %c0_i32, %c0_i32_0 : i32, i32
  }
  func.func @transform_3(%arg0: i32) -> (i32, i32) {
    %c0_i32 = arith.constant 0 : i32
    %c0_i32_0 = arith.constant 0 : i32
    %c0_i32_1 = arith.constant 0 : i32
    return %c0_i32, %c0_i32_0 : i32, i32
  }
  func.func @transform_4(%arg0: i32) -> (i32, i32) {
    %c0_i32 = arith.constant 0 : i32
    %c0_i32_0 = arith.constant 0 : i32
    %c0_i32_1 = arith.constant 0 : i32
    return %c0_i32, %c0_i32_0 : i32, i32
  }
  func.func @transform_5(%arg0: i32) -> (i32, i32) {
    %c0_i32 = arith.constant 0 : i32
    %c0_i32_0 = arith.constant 0 : i32
    return %arg0, %c0_i32 : i32, i32
  }
}

</mosaic_0001>

<llo_original>
// kernel: tpu_custom_call.1
$region0: #{tpu_custom_call.1}
  #allocation0 [shape = 'u32[]', space=smem, size = 0x4, offset = 0x4, fixed_abs, tag = 'smem constant byte address 0x4 - core index']
  #allocation1 [shape = 'u32[144,128]{1,0:T(1,128)}', space=vmem, size = 0x12000, scoped, tag = 'internal scratch']
  %s0 = inlined_call_operand.hbm [shape: bf16[16,16], index: 0, kind: input, shape index: {}]
  %s1 = inlined_call_operand.hbm [shape: bf16[16,128], index: 1, kind: input, shape index: {}]
  %s2 = inlined_call_operand.vmem [shape: f32[1,128], index: 2, kind: input, shape index: {}]
  %s3 = inlined_call_operand.hbm [shape: bf16[128,128], index: 3, kind: input, shape index: {}]
  %s4 = inlined_call_operand.vmem [shape: f32[1,128], index: 4, kind: input, shape index: {}]
  %s5 = inlined_call_operand.hbm [shape: f32[16,128], index: 5, kind: output, shape index: {}]
  %s6 = sld [smem:[#allocation0]]
  $region42: #{tpu_custom_call.1} parent=0
    _
  %s8 = ssub.s32 1, %s6
  %s9 = scalar_select 0, %s8, %s6
  $region1: #{tpu_custom_call.1} parent=0
    #allocation2 [shape = 'u8[4096]{0}', space=vmem, size = 0x1000, scoped, tag = 'input window, operand 0, single buffered']
    #allocation3 [shape = 's32[1]{0}', space=sflag, size = 0x4, scoped, tag = 'scoped memory for tpu_custom_call.1']
    #allocation4 [shape = 's32[1]{0}', space=sflag, size = 0x4, scoped, tag = 'scoped memory for tpu_custom_call.1']
    #allocation5 [shape = 'u8[4096]{0}', space=vmem, size = 0x1000, scoped, tag = 'input window, operand 1, single buffered']
    #allocation6 [shape = 's32[1]{0}', space=sflag, size = 0x4, scoped, tag = 'scoped memory for tpu_custom_call.1']
    #allocation7 [shape = 'u8[32768]{0}', space=vmem, size = 0x8000, scoped, tag = 'input window, operand 3, single buffered']
    #allocation8 [shape = 'u8[8192]{0}', space=vmem, size = 0x2000, scoped, tag = 'output window, operand 0, single buffered']
    %10 = vsyncpa [#allocation3], 0
    %11 = vsyncpa [#allocation6], 0
    %12 = vsyncpa [#allocation4], 0
    // Predicated region
    $region2: #{tpu_custom_call.1} parent=1 // pred_check
      _
    $region3: #{tpu_custom_call.1} parent=1 // pred_check_branch
      %14 = sbr.rel (0) target = $region5
    $region4: #{tpu_custom_call.1} parent=1 // pred_region
      %s16 = ssub.s32 128, 128
      %17 = vsyncadd [#allocation3], %s16
      %s18 = sshll.u32 [#allocation2], 4
      %s19 = int_to_ptr.vmem [resolvable:$true] %s18
      %24 = dma.hbm_to_vmem [thread:$0]  %s0, 128, %s19, [#allocation3], 64, 64, 4
    $region5: #{tpu_custom_call.1} parent=1 // pred_fallthru
      _
    // Predicated region
    $region6: #{tpu_custom_call.1} parent=1 // pred_check
      _
    $region7: #{tpu_custom_call.1} parent=1 // pred_check_branch
      %26 = sbr.rel (0) target = $region9
    $region8: #{tpu_custom_call.1} parent=1 // pred_region
      %s28 = ssub.s32 128, 128
      %29 = vsyncadd [#allocation6], %s28
      %s30 = sshll.u32 [#allocation5], 4
      %s31 = int_to_ptr.vmem [resolvable:$true] %s30
      %36 = dma.hbm_to_vmem [thread:$0]  %s1, 128, %s31, [#allocation6], 64, 64, 4
    $region9: #{tpu_custom_call.1} parent=1 // pred_fallthru
      _
    // Predicated region
    $region10: #{tpu_custom_call.1} parent=1 // pred_check
      _
    $region11: #{tpu_custom_call.1} parent=1 // pred_check_branch
      %38 = sbr.rel (0) target = $region13
    $region12: #{tpu_custom_call.1} parent=1 // pred_region
      _
    $region13: #{tpu_custom_call.1} parent=1 // pred_fallthru
      _
    // Predicated region
    $region14: #{tpu_custom_call.1} parent=1 // pred_check
      _
    $region15: #{tpu_custom_call.1} parent=1 // pred_check_branch
      %40 = sbr.rel (0) target = $region17
    $region16: #{tpu_custom_call.1} parent=1 // pred_region
      %s42 = ssub.s32 1024, 1024
      %43 = vsyncadd [#allocation6], %s42
      %s44 = sshll.u32 [#allocation7], 4
      %s45 = int_to_ptr.vmem [resolvable:$true] %s44
      %50 = dma.hbm_to_vmem [thread:$0]  %s3, 1024, %s45, [#allocation6], 64, 64, 4
    $region17: #{tpu_custom_call.1} parent=1 // pred_fallthru
      _
    // Predicated region
    $region18: #{tpu_custom_call.1} parent=1 // pred_check
      _
    $region19: #{tpu_custom_call.1} parent=1 // pred_check_branch
      %52 = sbr.rel (0) target = $region21
    $region20: #{tpu_custom_call.1} parent=1 // pred_region
      _
    $region21: #{tpu_custom_call.1} parent=1 // pred_fallthru
      _
    // Predicated region
    $region22: #{tpu_custom_call.1} parent=1 // pred_check
      _
    $region23: #{tpu_custom_call.1} parent=1 // pred_check_branch
      %54 = sbr.rel (0) target = $region25
    $region24: #{tpu_custom_call.1} parent=1 // pred_region
      %55 = dma.done [#allocation3], 128
    $region25: #{tpu_custom_call.1} parent=1 // pred_fallthru
      _
    // Predicated region
    $region26: #{tpu_custom_call.1} parent=1 // pred_check
      _
    $region27: #{tpu_custom_call.1} parent=1 // pred_check_branch
      %57 = sbr.rel (0) target = $region29
    $region28: #{tpu_custom_call.1} parent=1 // pred_region
      %58 = dma.done [#allocation6], 128
    $region29: #{tpu_custom_call.1} parent=1 // pred_fallthru
      _
    // Predicated region
    $region30: #{tpu_custom_call.1} parent=1 // pred_check
      _
    $region31: #{tpu_custom_call.1} parent=1 // pred_check_branch
      %60 = sbr.rel (0) target = $region33
    $region32: #{tpu_custom_call.1} parent=1 // pred_region
      %61 = dma.done [#allocation6], 1024
    $region33: #{tpu_custom_call.1} parent=1 // pred_fallthru
      _
    %v63 = vld [vmem:[#allocation2] sm:$0xf]
    %v64 = vld [vmem:[#allocation2 + $0x4] sm:$0xf]
    %v65 = vld [vmem:[#allocation5] sm:$0xf]
    %v66 = vld [vmem:[#allocation5 + $0x4] sm:$0xf]
    %v67 = vld [vmem:[%s2] sm:$0x1]
    %v69 = vlaneseq
    %v70 = vshrl.u32 %v69, 7
    %v71 = vsub.s32 0, %v70
    %v72 = vrot.slane %v67, %v71
    %v76 = vunpack.c.l.b16 %v63
    %v77 = vunpack.c.l.b16 %v64
    %v78 = vpack.c.b16 %v77, %v76
    %v81 = vunpack.c.l.b16 %v65
    %v82 = vunpack.c.l.b16 %v66
    %v83 = vpack.c.b16 %v82, %v81
    %vm85 = vcmask 130048
    %v87 = vsel %vm85, %v78, 0
    %89 = vmatprep.subr.bf16.mxu0 0
    %90 = vmatpush1.bf16.msra.mxu0 %v83
    %91 = vmatprep.subr.bf16.mxu0 0
    %92 = vmatpush1.bf16.msra.mxu0 0
    %93 = vmatprep.subr.bf16.mxu0 0
    %94 = vmatpush1.bf16.msra.mxu0 0
    %95 = vmatprep.subr.bf16.mxu0 0
    %96 = vmatpush1.bf16.msra.mxu0 0
    %97 = vmatprep.subr.bf16.mxu0 0
    %98 = vmatpush1.bf16.msra.mxu0 0
    %99 = vmatprep.subr.bf16.mxu0 0
    %100 = vmatpush1.bf16.msra.mxu0 0
    %101 = vmatprep.subr.bf16.mxu0 0
    %102 = vmatpush1.bf16.msra.mxu0 0
    %103 = vmatprep.subr.bf16.mxu0 0
    %104 = vmatpush1.bf16.msra.mxu0 0
    %105 = vmatprep.subr.bf16.mxu0 0
    %106 = vmatpush1.bf16.msra.mxu0 0
    %107 = vmatprep.subr.bf16.mxu0 0
    %108 = vmatpush1.bf16.msra.mxu0 0
    %109 = vmatprep.subr.bf16.mxu0 0
    %110 = vmatpush1.bf16.msra.mxu0 0
    %111 = vmatprep.subr.bf16.mxu0 0
    %112 = vmatpush1.bf16.msra.mxu0 0
    %113 = vmatprep.subr.bf16.mxu0 0
    %114 = vmatpush1.bf16.msra.mxu0 0
    %115 = vmatprep.subr.bf16.mxu0 0
    %116 = vmatpush1.bf16.msra.mxu0 0
    %117 = vmatprep.subr.bf16.mxu0 0
    %118 = vmatpush1.bf16.msra.mxu0 0
    %119 = vmatprep.subr.bf16.mxu0 0
    %120 = vmatpush1.bf16.msra.mxu0 0
    %121 = vmatprep.mubr.bf16.mxu0 0
    %122 = vmatmul.mubr.bf16.gmra.mrb[0].mxu0 %v87
    %v123 = vpop.f32.mrb[0].mxu0
    %v124 = vadd.f32 %v72, %v123
    %v125 = vpop.f32.mrb[0].mxu0
    %v126 = vpop.f32.mrb[0].mxu0
    %v127 = vadd.f32 %v72, %v126
    %v128 = vpop.f32.mrb[0].mxu0
    %129 = vdwg.mxu0
    %v130 = vtanh.pop %v124
    %v131 = vtanh.pop %v127
    %v132 = vpack.c.bf16 %v131, %v130
    %v133 = vld [vmem:[#allocation7] sm:$0xf]
    %v134 = vld [vmem:[#allocation7 + $0x4] sm:$0xf]
    %v135 = vld [vmem:[#allocation7 + $0x8] sm:$0xf]
    %v136 = vld [vmem:[#allocation7 + $0xc] sm:$0xf]
    %v137 = vld [vmem:[#allocation7 + $0x10] sm:$0xf]
    %v138 = vld [vmem:[#allocation7 + $0x14] sm:$0xf]
    %v139 = vld [vmem:[#allocation7 + $0x18] sm:$0xf]
    %v140 = vld [vmem:[#allocation7 + $0x1c] sm:$0xf]
    %v141 = vld [vmem:[#allocation7 + $0x20] sm:$0xf]
    %v142 = vld [vmem:[#allocation7 + $0x24] sm:$0xf]
    %v143 = vld [vmem:[#allocation7 + $0x28] sm:$0xf]
    %v144 = vld [vmem:[#allocation7 + $0x2c] sm:$0xf]
    %v145 = vld [vmem:[#allocation7 + $0x30] sm:$0xf]
    %v146 = vld [vmem:[#allocation7 + $0x34] sm:$0xf]
    %v147 = vld [vmem:[#allocation7 + $0x38] sm:$0xf]
    %v148 = vld [vmem:[#allocation7 + $0x3c] sm:$0xf]
    %v149 = vld [vmem:[%s4] sm:$0x1]
    %v151 = vlaneseq
    %v152 = vshrl.u32 %v151, 7
    %v153 = vsub.s32 0, %v152
    %v154 = vrot.slane %v149, %v153
    %v172 = vunpack.c.l.b16 %v133
    %v173 = vunpack.c.l.b16 %v134
    %v174 = vunpack.c.l.b16 %v135
    %v175 = vunpack.c.l.b16 %v136
    %v176 = vunpack.c.l.b16 %v137
    %v177 = vunpack.c.l.b16 %v138
    %v178 = vunpack.c.l.b16 %v139
    %v179 = vunpack.c.l.b16 %v140
    %v180 = vunpack.c.l.b16 %v141
    %v181 = vunpack.c.l.b16 %v142
    %v182 = vunpack.c.l.b16 %v143
    %v183 = vunpack.c.l.b16 %v144
    %v184 = vunpack.c.l.b16 %v145
    %v185 = vunpack.c.l.b16 %v146
    %v186 = vunpack.c.l.b16 %v147
    %v187 = vunpack.c.l.b16 %v148
    %v188 = vpack.c.b16 %v173, %v172
    %v189 = vpack.c.b16 %v175, %v174
    %v190 = vpack.c.b16 %v177, %v176
    %v191 = vpack.c.b16 %v179, %v178
    %v192 = vpack.c.b16 %v181, %v180
    %v193 = vpack.c.b16 %v183, %v182
    %v194 = vpack.c.b16 %v185, %v184
    %v195 = vpack.c.b16 %v187, %v186
    %204 = vmatprep.subr.bf16.mxu0 0
    %205 = vmatpush1.bf16.msra.mxu0 %v188
    %206 = vmatprep.subr.bf16.mxu0 0
    %207 = vmatpush1.bf16.msra.mxu0 %v189
    %208 = vmatprep.subr.bf16.mxu0 0
    %209 = vmatpush1.bf16.msra.mxu0 %v190
    %210 = vmatprep.subr.bf16.mxu0 0
    %211 = vmatpush1.bf16.msra.mxu0 %v191
    %212 = vmatprep.subr.bf16.mxu0 0
    %213 = vmatpush1.bf16.msra.mxu0 %v192
    %214 = vmatprep.subr.bf16.mxu0 0
    %215 = vmatpush1.bf16.msra.mxu0 %v193
    %216 = vmatprep.subr.bf16.mxu0 0
    %217 = vmatpush1.bf16.msra.mxu0 %v194
    %218 = vmatprep.subr.bf16.mxu0 0
    %219 = vmatpush1.bf16.msra.mxu0 %v195
    %220 = vmatprep.subr.bf16.mxu0 0
    %221 = vmatpush1.bf16.msra.mxu0 0
    %222 = vmatprep.subr.bf16.mxu0 0
    %223 = vmatpush1.bf16.msra.mxu0 0
    %224 = vmatprep.subr.bf16.mxu0 0
    %225 = vmatpush1.bf16.msra.mxu0 0
    %226 = vmatprep.subr.bf16.mxu0 0
    %227 = vmatpush1.bf16.msra.mxu0 0
    %228 = vmatprep.subr.bf16.mxu0 0
    %229 = vmatpush1.bf16.msra.mxu0 0
    %230 = vmatprep.subr.bf16.mxu0 0
    %231 = vmatpush1.bf16.msra.mxu0 0
    %232 = vmatprep.subr.bf16.mxu0 0
    %233 = vmatpush1.bf16.msra.mxu0 0
    %234 = vmatprep.subr.bf16.mxu0 0
    %235 = vmatpush1.bf16.msra.mxu0 0
    %236 = vmatprep.mubr.bf16.mxu0 0
    %237 = vmatmul.mubr.bf16.gmra.mrb[0].mxu0 %v132
    %v238 = vpop.f32.mrb[0].mxu0
    %v239 = vadd.f32 %v154, %v238
    %v240 = vpop.f32.mrb[0].mxu0
    %v241 = vpop.f32.mrb[0].mxu0
    %v242 = vadd.f32 %v154, %v241
    %v243 = vpop.f32.mrb[0].mxu0
    %244 = vdwg.mxu0
    %245 = vst [vmem:[#allocation8] sm:$0xff] %v239
    %246 = vst [vmem:[#allocation8 + $0x8] sm:$0xff] %v242
    // Predicated region
    $region34: #{tpu_custom_call.1} parent=1 // pred_check
      _
    $region35: #{tpu_custom_call.1} parent=1 // pred_check_branch
      %248 = sbr.rel (0) target = $region37
    $region36: #{tpu_custom_call.1} parent=1 // pred_region
      %s250 = ssub.s32 256, 256
      %251 = vsyncadd [#allocation4], %s250
      %s252 = sshll.u32 [#allocation8], 4
      %s253 = int_to_ptr.vmem [resolvable:$true] %s252
      %258 = dma.vmem_to_hbm [thread:$0]  %s253, 256, %s5, [#allocation4], 128, 128, 8
    $region37: #{tpu_custom_call.1} parent=1 // pred_fallthru
      _
    // Predicated region
    $region38: #{tpu_custom_call.1} parent=1 // pred_check
      _
    $region39: #{tpu_custom_call.1} parent=1 // pred_check_branch
      %260 = sbr.rel (0) target = $region41
    $region40: #{tpu_custom_call.1} parent=1 // pred_region
      %261 = dma.done [#allocation4], 256
    $region41: #{tpu_custom_call.1} parent=1 // pred_fallthru
      _
    %262 = vsyncpa [#allocation3], 1
    %263 = vsyncpa [#allocation6], 1
    %264 = vsyncpa [#allocation4], 1

</llo_original>
